<compile_context>
chip_gen: v5e
topology: v5e:2x2
jax: 0.10.0
libtpu: 0.0.40
codegen_flags: <defaults>
</compile_context>

<pallas_src>
import functools

import jax
import jax.numpy as jnp
from jax.experimental import pallas as pl
from jax.experimental.pallas import tpu as pltpu

INPUT_SIZE = 784
HIDDEN1 = 256
HIDDEN2 = 128
NUM_CLASSES = 10

N_PAD = 128       # 10 -> 128 (lane-dense output tile)


def _cdiv(a, b):
    return -(-a // b)


def _round_up(x, m):
    return _cdiv(x, m) * m


def _choose_tile(batch, tb):
    """Pick (TB, Bp): TB multiple of 16, small padding waste, >=2 grid steps
    when there is enough work (so v7x's two TensorCores both get batch tiles)."""
    b16 = _round_up(max(batch, 1), 16)
    n_tiles = _cdiv(b16, tb)
    if n_tiles < 2 and b16 >= 32:
        n_tiles = 2                      # v7x megacore: give each TC work
    tile = _round_up(_cdiv(b16, n_tiles), 16)
    bp = _round_up(b16, tile)
    return tile, bp


def mlp_kernel(x_ref, w1_ref, b1_ref, w2_ref, b2_ref, w3_ref, b3_ref, o_ref):
    # f32 -> bf16 cast in-kernel (VPU filler, hidden under DMA/MXU).
    x = x_ref[...].astype(jnp.bfloat16)
    # fc1 + ReLU  (bf16 MXU inputs, f32 accumulation / epilogue)
    h1 = jnp.dot(x, w1_ref[...], preferred_element_type=jnp.float32)
    h1 = jnp.maximum(h1 + b1_ref[...], 0.0).astype(jnp.bfloat16)
    # fc2 + ReLU
    h2 = jnp.dot(h1, w2_ref[...], preferred_element_type=jnp.float32)
    h2 = jnp.maximum(h2 + b2_ref[...], 0.0).astype(jnp.bfloat16)
    # fc3 (logits, padded to 128 lanes; no activation); bf16 store (lane-dense)
    out = jnp.dot(h2, w3_ref[...], preferred_element_type=jnp.float32)
    o_ref[...] = (out + b3_ref[...]).astype(o_ref.dtype)


def prepare_params(params):
    """One-time casting / padding / reshaping of f32 params for the kernel."""
    w1 = params["w1"].astype(jnp.bfloat16)                                   # (784, 256)
    w2 = params["w2"].astype(jnp.bfloat16)                                   # (256, 128)
    w3 = jnp.pad(params["w3"], ((0, 0), (0, N_PAD - NUM_CLASSES)))           # (128, 128)
    b1 = params["b1"].reshape(1, -1).astype(jnp.float32)                     # (1, 256)
    b2 = params["b2"].reshape(1, -1).astype(jnp.float32)                     # (1, 128)
    b3 = jnp.pad(params["b3"], (0, N_PAD - NUM_CLASSES)).reshape(1, -1)      # (1, 128)
    return {
        "w1": w1,
        "w2": w2,
        "w3": w3.astype(jnp.bfloat16),
        "b1": b1,
        "b2": b2,
        "b3": b3.astype(jnp.float32),
    }


@functools.partial(jax.jit, static_argnames=("tb",))
def mlp_forward(x, prep, tb=2048):
    """x: (B, C, H, W) or (B, 784) f32. prep: output of prepare_params."""
    B = x.shape[0]
    x2d = x.reshape(B, -1).astype(jnp.float32)           # == torch x.view(B, -1)
    assert x2d.shape[1] == INPUT_SIZE, x2d.shape

    TB, Bp = _choose_tile(B, tb)
    # Only the (small) batch-row pad remains; no feature pad, no wrapper cast.
    xp = x2d if Bp == B else jnp.pad(x2d, ((0, Bp - B), (0, 0)))

    w1, b1 = prep["w1"], prep["b1"]
    w2, b2 = prep["w2"], prep["b2"]
    w3, b3 = prep["w3"], prep["b3"]

    grid = (Bp // TB,)
    const = lambda i: (0, 0)  # weights / biases resident across all steps

    weight_bytes = (w1.size + w2.size + w3.size) * 2 + (b1.size + b2.size + b3.size) * 4
    cost = pl.CostEstimate(
        flops=2 * Bp * (INPUT_SIZE * HIDDEN1 + HIDDEN1 * HIDDEN2 + HIDDEN2 * N_PAD),
        transcendentals=0,
        bytes_accessed=Bp * INPUT_SIZE * 4 + Bp * N_PAD * 2 + weight_bytes,
    )

    out = pl.pallas_call(
        mlp_kernel,
        out_shape=jax.ShapeDtypeStruct((Bp, N_PAD), jnp.bfloat16),
        grid=grid,
        in_specs=[
            pl.BlockSpec((TB, INPUT_SIZE), lambda i: (i, 0)),   # x tile (f32, K=784)
            pl.BlockSpec((INPUT_SIZE, HIDDEN1), const),         # w1
            pl.BlockSpec((1, HIDDEN1), const),                  # b1
            pl.BlockSpec((HIDDEN1, HIDDEN2), const),            # w2
            pl.BlockSpec((1, HIDDEN2), const),                  # b2
            pl.BlockSpec((HIDDEN2, N_PAD), const),              # w3 (padded cols)
            pl.BlockSpec((1, N_PAD), const),                    # b3 (padded)
        ],
        out_specs=pl.BlockSpec((TB, N_PAD), lambda i: (i, 0)),
        compiler_params=pltpu.CompilerParams(
            dimension_semantics=("parallel",),
            vmem_limit_bytes=48 * 1024 * 1024,
        ),
        cost_estimate=cost,
    )(xp, w1, b1, w2, b2, w3, b3)

    # Slice off batch/logit padding; cast back to f32 for the consumer (fuses).
    return out[:B, :NUM_CLASSES].astype(jnp.float32)


def init_params(key, input_size=INPUT_SIZE, hidden1=HIDDEN1, hidden2=HIDDEN2,
                num_classes=NUM_CLASSES):
    """Deterministic init mimicking nn.Linear's U(-1/sqrt(fan_in), 1/sqrt(fan_in))."""
    ks = jax.random.split(key, 6)

    def linear(kw, kb, fan_in, fan_out):
        bound = 1.0 / jnp.sqrt(fan_in)
        w = jax.random.uniform(kw, (fan_in, fan_out), jnp.float32, -bound, bound)
        b = jax.random.uniform(kb, (fan_out,), jnp.float32, -bound, bound)
        return w, b

    w1, b1 = linear(ks[0], ks[1], input_size, hidden1)
    w2, b2 = linear(ks[2], ks[3], hidden1, hidden2)
    w3, b3 = linear(ks[4], ks[5], hidden2, num_classes)
    return {"w1": w1, "b1": b1, "w2": w2, "b2": b2, "w3": w3, "b3": b3}


def mlp_reference(x, params):
    x2d = x.reshape(x.shape[0], -1)
    h1 = jnp.maximum(x2d @ params["w1"] + params["b1"], 0.0)
    h2 = jnp.maximum(h1 @ params["w2"] + params["b2"], 0.0)
    return h2 @ params["w3"] + params["b3"]


if __name__ == "__main__":
    key = jax.random.PRNGKey(0)
    kx, kp = jax.random.split(key)

    # MNIST-like input: batch=2, NCHW (2, 1, 28, 28) -> flattened 784 features.
    x = jax.random.normal(kx, (2, 1, 28, 28), jnp.float32)
    params = init_params(kp)
    prep = prepare_params(params)

    out = mlp_forward(x, prep)
    out = jax.block_until_ready(out)

    ref = mlp_reference(x, params)
    assert out.shape == (2, NUM_CLASSES), out.shape
    # bf16 matmul inputs / bf16 logits store with f32 accumulation -> loosened
    # tolerance vs the f32 reference.
    assert jnp.allclose(out, ref, atol=5e-2, rtol=5e-2), (
        "mismatch vs JAX reference: max abs diff = "
        f"{float(jnp.max(jnp.abs(out - ref)))}"
    )

    print("KERNEL_OK")
</pallas_src>

<mosaic_0001>
module attributes {stable_mosaic.version = 11 : i64} {
  func.func @mlp_kernel(%arg0: i32, %arg1: memref<16x784xf32, #tpu.memory_space<vmem>>, %arg2: memref<784x256xbf16, #tpu.memory_space<vmem>>, %arg3: memref<1x256xf32, #tpu.memory_space<vmem>>, %arg4: memref<256x128xbf16, #tpu.memory_space<vmem>>, %arg5: memref<1x128xf32, #tpu.memory_space<vmem>>, %arg6: memref<128x128xbf16, #tpu.memory_space<vmem>>, %arg7: memref<1x128xf32, #tpu.memory_space<vmem>>, %arg8: memref<16x128xbf16, #tpu.memory_space<vmem>>) attributes {dimension_semantics = [#tpu.dimension_semantics<parallel>], iteration_bounds = array<i64: 1>, scalar_prefetch = 0 : i64, scratch_operands = 0 : i64, tpu.core_type = #tpu.core_type<tc>, window_params = [{transform_indices = @transform_0, window_bounds = array<i64: 16, 784>}, {pipeline_mode = #tpu.pipeline_mode<synchronous>, transform_indices = @transform_1, window_bounds = array<i64: 784, 256>}, {pipeline_mode = #tpu.pipeline_mode<synchronous>, transform_indices = @transform_2, window_bounds = array<i64: 1, 256>}, {pipeline_mode = #tpu.pipeline_mode<synchronous>, transform_indices = @transform_3, window_bounds = array<i64: 256, 128>}, {pipeline_mode = #tpu.pipeline_mode<synchronous>, transform_indices = @transform_4, window_bounds = array<i64: 1, 128>}, {pipeline_mode = #tpu.pipeline_mode<synchronous>, transform_indices = @transform_5, window_bounds = array<i64: 128, 128>}, {pipeline_mode = #tpu.pipeline_mode<synchronous>, transform_indices = @transform_6, window_bounds = array<i64: 1, 128>}, {transform_indices = @transform_7, window_bounds = array<i64: 16, 128>}]} {
    %c0 = arith.constant 0 : index
    %c0_0 = arith.constant 0 : index
    %0 = vector.load %arg1[%c0, %c0_0] : memref<16x784xf32, #tpu.memory_space<vmem>>, vector<16x784xf32>
    %1 = arith.truncf %0 : vector<16x784xf32> to vector<16x784xbf16>
    %c0_1 = arith.constant 0 : index
    %c0_2 = arith.constant 0 : index
    %2 = vector.load %arg2[%c0_1, %c0_2] : memref<784x256xbf16, #tpu.memory_space<vmem>>, vector<784x256xbf16>
    %cst = arith.constant dense<0.000000e+00> : vector<16x256xf32>
    %3 = tpu.matmul %1, %2, %cst {dimension_numbers = #tpu.dot_dimension_numbers<[1], [0], [0], [1], [0, 0, 1, 1], [], []>} : vector<16x784xbf16>, vector<784x256xbf16>, vector<16x256xf32> -> vector<16x256xf32>
    %c0_3 = arith.constant 0 : index
    %c0_4 = arith.constant 0 : index
    %4 = vector.load %arg3[%c0_3, %c0_4] : memref<1x256xf32, #tpu.memory_space<vmem>>, vector<1x256xf32>
    %5 = vector.broadcast %4 : vector<1x256xf32> to vector<16x256xf32>
    %6 = arith.addf %3, %5 : vector<16x256xf32>
    %cst_5 = arith.constant 0.000000e+00 : f32
    %7 = vector.broadcast %cst_5 : f32 to vector<16x256xf32>
    %8 = arith.maximumf %6, %7 : vector<16x256xf32>
    %9 = arith.truncf %8 : vector<16x256xf32> to vector<16x256xbf16>
    %c0_6 = arith.constant 0 : index
    %c0_7 = arith.constant 0 : index
    %10 = vector.load %arg4[%c0_6, %c0_7] : memref<256x128xbf16, #tpu.memory_space<vmem>>, vector<256x128xbf16>
    %cst_8 = arith.constant dense<0.000000e+00> : vector<16x128xf32>
    %11 = tpu.matmul %9, %10, %cst_8 {dimension_numbers = #tpu.dot_dimension_numbers<[1], [0], [0], [1], [0, 0, 1, 1], [], []>} : vector<16x256xbf16>, vector<256x128xbf16>, vector<16x128xf32> -> vector<16x128xf32>
    %c0_9 = arith.constant 0 : index
    %c0_10 = arith.constant 0 : index
    %12 = vector.load %arg5[%c0_9, %c0_10] : memref<1x128xf32, #tpu.memory_space<vmem>>, vector<1x128xf32>
    %13 = vector.broadcast %12 : vector<1x128xf32> to vector<16x128xf32>
    %14 = arith.addf %11, %13 : vector<16x128xf32>
    %cst_11 = arith.constant 0.000000e+00 : f32
    %15 = vector.broadcast %cst_11 : f32 to vector<16x128xf32>
    %16 = arith.maximumf %14, %15 : vector<16x128xf32>
    %17 = arith.truncf %16 : vector<16x128xf32> to vector<16x128xbf16>
    %c0_12 = arith.constant 0 : index
    %c0_13 = arith.constant 0 : index
    %18 = vector.load %arg6[%c0_12, %c0_13] : memref<128x128xbf16, #tpu.memory_space<vmem>>, vector<128x128xbf16>
    %cst_14 = arith.constant dense<0.000000e+00> : vector<16x128xf32>
    %19 = tpu.matmul %17, %18, %cst_14 {dimension_numbers = #tpu.dot_dimension_numbers<[1], [0], [0], [1], [0, 0, 1, 1], [], []>} : vector<16x128xbf16>, vector<128x128xbf16>, vector<16x128xf32> -> vector<16x128xf32>
    %c0_15 = arith.constant 0 : index
    %c0_16 = arith.constant 0 : index
    %20 = vector.load %arg7[%c0_15, %c0_16] : memref<1x128xf32, #tpu.memory_space<vmem>>, vector<1x128xf32>
    %21 = vector.broadcast %20 : vector<1x128xf32> to vector<16x128xf32>
    %22 = arith.addf %19, %21 : vector<16x128xf32>
    %23 = arith.truncf %22 : vector<16x128xf32> to vector<16x128xbf16>
    %c0_17 = arith.constant 0 : index
    %c0_18 = arith.constant 0 : index
    %24 = vector.load %arg8[%c0_17, %c0_18] : memref<16x128xbf16, #tpu.memory_space<vmem>>, vector<16x128xbf16>
    tpu.vector_store %arg8[%c0_17, %c0_18], %23 {strides = array<i32>} : memref<16x128xbf16, #tpu.memory_space<vmem>>, vector<16x128xbf16>,
    return
  }
  func.func @transform_0(%arg0: i32) -> (i32, i32) {
    %c0_i32 = arith.constant 0 : i32
    %c0_i32_0 = arith.constant 0 : i32
    return %arg0, %c0_i32 : i32, i32
  }
  func.func @transform_1(%arg0: i32) -> (i32, i32) {
    %c0_i32 = arith.constant 0 : i32
    %c0_i32_0 = arith.constant 0 : i32
    %c0_i32_1 = arith.constant 0 : i32
    return %c0_i32, %c0_i32_0 : i32, i32
  }
  func.func @transform_2(%arg0: i32) -> (i32, i32) {
    %c0_i32 = arith.constant 0 : i32
    %c0_i32_0 = arith.constant 0 : i32
    %c0_i32_1 = arith.constant 0 : i32
    return %c0_i32, %c0_i32_0 : i32, i32
  }
  func.func @transform_3(%arg0: i32) -> (i32, i32) {
    %c0_i32 = arith.constant 0 : i32
    %c0_i32_0 = arith.constant 0 : i32
    %c0_i32_1 = arith.constant 0 : i32
    return %c0_i32, %c0_i32_0 : i32, i32
  }
  func.func @transform_4(%arg0: i32) -> (i32, i32) {
    %c0_i32 = arith.constant 0 : i32
    %c0_i32_0 = arith.constant 0 : i32
    %c0_i32_1 = arith.constant 0 : i32
    return %c0_i32, %c0_i32_0 : i32, i32
  }
  func.func @transform_5(%arg0: i32) -> (i32, i32) {
    %c0_i32 = arith.constant 0 : i32
    %c0_i32_0 = arith.constant 0 : i32
    %c0_i32_1 = arith.constant 0 : i32
    return %c0_i32, %c0_i32_0 : i32, i32
  }
  func.func @transform_6(%arg0: i32) -> (i32, i32) {
    %c0_i32 = arith.constant 0 : i32
    %c0_i32_0 = arith.constant 0 : i32
    %c0_i32_1 = arith.constant 0 : i32
    return %c0_i32, %c0_i32_0 : i32, i32
  }
  func.func @transform_7(%arg0: i32) -> (i32, i32) {
    %c0_i32 = arith.constant 0 : i32
    %c0_i32_0 = arith.constant 0 : i32
    return %arg0, %c0_i32 : i32, i32
  }
}

</mosaic_0001>

<llo_original>
// kernel: mlp_forward.1
$region0: #{mlp_forward.1}
  #allocation0 [shape = 'u32[]', space=smem, size = 0x4, offset = 0x4, fixed_abs, tag = 'smem constant byte address 0x4 - core index']
  #allocation1 [shape = 'u32[72,128]{1,0:T(1,128)}', space=vmem, size = 0x9000, scoped, tag = 'internal scratch']
  %s0 = inlined_call_operand.vmem [shape: f32[16,784], index: 0, kind: input, shape index: {}]
  %s1 = inlined_call_operand.hbm [shape: bf16[784,256], index: 1, kind: input, shape index: {}]
  %s2 = inlined_call_operand.vmem [shape: f32[1,256], index: 2, kind: input, shape index: {}]
  %s3 = inlined_call_operand.vmem [shape: bf16[256,128], index: 3, kind: input, shape index: {}]
  %s4 = inlined_call_operand.vmem [shape: f32[1,128], index: 4, kind: input, shape index: {}]
  %s5 = inlined_call_operand.vmem [shape: bf16[128,128], index: 5, kind: input, shape index: {}]
  %s6 = inlined_call_operand.vmem [shape: f32[1,128], index: 6, kind: input, shape index: {}]
  %s7 = inlined_call_operand.vmem [shape: bf16[16,128], index: 7, kind: output, shape index: {}]
  %s8 = sld [smem:[#allocation0]]
  $region42: #{mlp_forward.1} parent=0
    _
  %s10 = ssub.s32 1, %s8
  %s11 = scalar_select 0, %s10, %s8
  $region1: #{mlp_forward.1} parent=0
    #allocation2 [shape = 'u8[401408]{0}', space=vmem, size = 0x62000, scoped, tag = 'input window, operand 1, single buffered']
    #allocation3 [shape = 's32[1]{0}', space=sflag, size = 0x4, scoped, tag = 'scoped memory for mlp_forward.1']
    %12 = vsyncpa [#allocation3], 0
    // Predicated region
    $region2: #{mlp_forward.1} parent=1 // pred_check
      _
    $region3: #{mlp_forward.1} parent=1 // pred_check_branch
      %14 = sbr.rel (0) target = $region5
    $region4: #{mlp_forward.1} parent=1 // pred_region
      _
    $region5: #{mlp_forward.1} parent=1 // pred_fallthru
      _
    // Predicated region
    $region6: #{mlp_forward.1} parent=1 // pred_check
      _
    $region7: #{mlp_forward.1} parent=1 // pred_check_branch
      %16 = sbr.rel (0) target = $region9
    $region8: #{mlp_forward.1} parent=1 // pred_region
      %18 = vsyncadd [#allocation3], 0
      %s19 = sshll.u32 %s1, 4
      %s20 = int_to_ptr.hbm [resolvable:$true] %s19
      %s21 = sshll.u32 [#allocation2], 4
      %s22 = int_to_ptr.vmem [resolvable:$true] %s21
      %27 = dma.hbm_to_vmem [thread:$0]  %s20, 12544, %s22, [#allocation3], 128, 128, 8
    $region9: #{mlp_forward.1} parent=1 // pred_fallthru
      _
    // Predicated region
    $region10: #{mlp_forward.1} parent=1 // pred_check
      _
    $region11: #{mlp_forward.1} parent=1 // pred_check_branch
      %29 = sbr.rel (0) target = $region13
    $region12: #{mlp_forward.1} parent=1 // pred_region
      _
    $region13: #{mlp_forward.1} parent=1 // pred_fallthru
      _
    // Predicated region
    $region14: #{mlp_forward.1} parent=1 // pred_check
      _
    $region15: #{mlp_forward.1} parent=1 // pred_check_branch
      %31 = sbr.rel (0) target = $region17
    $region16: #{mlp_forward.1} parent=1 // pred_region
      _
    $region17: #{mlp_forward.1} parent=1 // pred_fallthru
      _
    // Predicated region
    $region18: #{mlp_forward.1} parent=1 // pred_check
      _
    $region19: #{mlp_forward.1} parent=1 // pred_check_branch
      %33 = sbr.rel (0) target = $region21
    $region20: #{mlp_forward.1} parent=1 // pred_region
      _
    $region21: #{mlp_forward.1} parent=1 // pred_fallthru
      _
    // Predicated region
    $region22: #{mlp_forward.1} parent=1 // pred_check
      _
    $region23: #{mlp_forward.1} parent=1 // pred_check_branch
      %35 = sbr.rel (0) target = $region25
    $region24: #{mlp_forward.1} parent=1 // pred_region
      _
    $region25: #{mlp_forward.1} parent=1 // pred_fallthru
      _
    // Predicated region
    $region26: #{mlp_forward.1} parent=1 // pred_check
      _
    $region27: #{mlp_forward.1} parent=1 // pred_check_branch
      %37 = sbr.rel (0) target = $region29
    $region28: #{mlp_forward.1} parent=1 // pred_region
      _
    $region29: #{mlp_forward.1} parent=1 // pred_fallthru
      _
    // Predicated region
    $region30: #{mlp_forward.1} parent=1 // pred_check
      _
    $region31: #{mlp_forward.1} parent=1 // pred_check_branch
      %39 = sbr.rel (0) target = $region33
    $region32: #{mlp_forward.1} parent=1 // pred_region
      %41 = dma.done [#allocation3], 12544
    $region33: #{mlp_forward.1} parent=1 // pred_fallthru
      _
    %v43 = vld [vmem:[%s0] sm:$0xff]
    %v44 = vld [vmem:[%s0 + $0x8] sm:$0xff]
    %v45 = vld [vmem:[%s0 + $0x10] sm:$0xff]
    %v46 = vld [vmem:[%s0 + $0x18] sm:$0xff]
    %v47 = vld [vmem:[%s0 + $0x20] sm:$0xff]
    %v48 = vld [vmem:[%s0 + $0x28] sm:$0xff]
    %v49 = vld [vmem:[%s0 + $0x30] sm:$0xff]
    %v50 = vld [vmem:[%s0 + $0x38] sm:$0xff]
    %v51 = vld [vmem:[%s0 + $0x40] sm:$0xff]
    %v52 = vld [vmem:[%s0 + $0x48] sm:$0xff]
    %v53 = vld [vmem:[%s0 + $0x50] sm:$0xff]
    %v54 = vld [vmem:[%s0 + $0x58] sm:$0xff]
    %v55 = vld [vmem:[%s0 + $0x60] sm:$0xff]
    %v56 = vld [vmem:[%s0 + $0x68] sm:$0xff]
    %v57 = vpack.c.bf16 %v50, %v43
    %v58 = vpack.c.bf16 %v51, %v44
    %v59 = vpack.c.bf16 %v52, %v45
    %v60 = vpack.c.bf16 %v53, %v46
    %v61 = vpack.c.bf16 %v54, %v47
    %v62 = vpack.c.bf16 %v55, %v48
    %v63 = vpack.c.bf16 %v56, %v49
    %v64 = vld [vmem:[#allocation2] sm:$0xff]
    %v65 = vld [vmem:[#allocation2 + $0x8] sm:$0xff]
    %v66 = vld [vmem:[#allocation2 + $0x10] sm:$0xff]
    %v67 = vld [vmem:[#allocation2 + $0x18] sm:$0xff]
    %v68 = vld [vmem:[#allocation2 + $0x20] sm:$0xff]
    %v69 = vld [vmem:[#allocation2 + $0x28] sm:$0xff]
    %v70 = vld [vmem:[#allocation2 + $0x30] sm:$0xff]
    %v71 = vld [vmem:[#allocation2 + $0x38] sm:$0xff]
    %v72 = vld [vmem:[#allocation2 + $0x40] sm:$0xff]
    %v73 = vld [vmem:[#allocation2 + $0x48] sm:$0xff]
    %v74 = vld [vmem:[#allocation2 + $0x50] sm:$0xff]
    %v75 = vld [vmem:[#allocation2 + $0x58] sm:$0xff]
    %v76 = vld [vmem:[#allocation2 + $0x60] sm:$0xff]
    %v77 = vld [vmem:[#allocation2 + $0x68] sm:$0xff]
    %v78 = vld [vmem:[#allocation2 + $0x70] sm:$0xff]
    %v79 = vld [vmem:[#allocation2 + $0x78] sm:$0xff]
    %v80 = vld [vmem:[#allocation2 + $0x80] sm:$0xff]
    %v81 = vld [vmem:[#allocation2 + $0x88] sm:$0xff]
    %v82 = vld [vmem:[#allocation2 + $0x90] sm:$0xff]
    %v83 = vld [vmem:[#allocation2 + $0x98] sm:$0xff]
    %v84 = vld [vmem:[#allocation2 + $0xa0] sm:$0xff]
    %v85 = vld [vmem:[#allocation2 + $0xa8] sm:$0xff]
    %v86 = vld [vmem:[#allocation2 + $0xb0] sm:$0xff]
    %v87 = vld [vmem:[#allocation2 + $0xb8] sm:$0xff]
    %v88 = vld [vmem:[#allocation2 + $0xc0] sm:$0xff]
    %v89 = vld [vmem:[#allocation2 + $0xc8] sm:$0xff]
    %v90 = vld [vmem:[#allocation2 + $0xd0] sm:$0xff]
    %v91 = vld [vmem:[#allocation2 + $0xd8] sm:$0xff]
    %v92 = vld [vmem:[#allocation2 + $0xe0] sm:$0xff]
    %v93 = vld [vmem:[#allocation2 + $0xe8] sm:$0xff]
    %v94 = vld [vmem:[#allocation2 + $0xf0] sm:$0xff]
    %v95 = vld [vmem:[#allocation2 + $0xf8] sm:$0xff]
    %v96 = vld [vmem:[#allocation2 + $0x100] sm:$0xff]
    %v97 = vld [vmem:[#allocation2 + $0x108] sm:$0xff]
    %v98 = vld [vmem:[#allocation2 + $0x110] sm:$0xff]
    %v99 = vld [vmem:[#allocation2 + $0x118] sm:$0xff]
    %v100 = vld [vmem:[#allocation2 + $0x120] sm:$0xff]
    %v101 = vld [vmem:[#allocation2 + $0x128] sm:$0xff]
    %v102 = vld [vmem:[#allocation2 + $0x130] sm:$0xff]
    %v103 = vld [vmem:[#allocation2 + $0x138] sm:$0xff]
    %v104 = vld [vmem:[#allocation2 + $0x140] sm:$0xff]
    %v105 = vld [vmem:[#allocation2 + $0x148] sm:$0xff]
    %v106 = vld [vmem:[#allocation2 + $0x150] sm:$0xff]
    %v107 = vld [vmem:[#allocation2 + $0x158] sm:$0xff]
    %v108 = vld [vmem:[#allocation2 + $0x160] sm:$0xff]
    %v109 = vld [vmem:[#allocation2 + $0x168] sm:$0xff]
    %v110 = vld [vmem:[#allocation2 + $0x170] sm:$0xff]
    %v111 = vld [vmem:[#allocation2 + $0x178] sm:$0xff]
    %v112 = vld [vmem:[#allocation2 + $0x180] sm:$0xff]
    %v113 = vld [vmem:[#allocation2 + $0x188] sm:$0xff]
    %v114 = vld [vmem:[#allocation2 + $0x190] sm:$0xff]
    %v115 = vld [vmem:[#allocation2 + $0x198] sm:$0xff]
    %v116 = vld [vmem:[#allocation2 + $0x1a0] sm:$0xff]
    %v117 = vld [vmem:[#allocation2 + $0x1a8] sm:$0xff]
    %v118 = vld [vmem:[#allocation2 + $0x1b0] sm:$0xff]
    %v119 = vld [vmem:[#allocation2 + $0x1b8] sm:$0xff]
    %v120 = vld [vmem:[#allocation2 + $0x1c0] sm:$0xff]
    %v121 = vld [vmem:[#allocation2 + $0x1c8] sm:$0xff]
    %v122 = vld [vmem:[#allocation2 + $0x1d0] sm:$0xff]
    %v123 = vld [vmem:[#allocation2 + $0x1d8] sm:$0xff]
    %v124 = vld [vmem:[#allocation2 + $0x1e0] sm:$0xff]
    %v125 = vld [vmem:[#allocation2 + $0x1e8] sm:$0xff]
    %v126 = vld [vmem:[#allocation2 + $0x1f0] sm:$0xff]
    %v127 = vld [vmem:[#allocation2 + $0x1f8] sm:$0xff]
    %v128 = vld [vmem:[#allocation2 + $0x200] sm:$0xff]
    %v129 = vld [vmem:[#allocation2 + $0x208] sm:$0xff]
    %v130 = vld [vmem:[#allocation2 + $0x210] sm:$0xff]
    %v131 = vld [vmem:[#allocation2 + $0x218] sm:$0xff]
    %v132 = vld [vmem:[#allocation2 + $0x220] sm:$0xff]
    %v133 = vld [vmem:[#allocation2 + $0x228] sm:$0xff]
    %v134 = vld [vmem:[#allocation2 + $0x230] sm:$0xff]
    %v135 = vld [vmem:[#allocation2 + $0x238] sm:$0xff]
    %v136 = vld [vmem:[#allocation2 + $0x240] sm:$0xff]
    %v137 = vld [vmem:[#allocation2 + $0x248] sm:$0xff]
    %v138 = vld [vmem:[#allocation2 + $0x250] sm:$0xff]
    %v139 = vld [vmem:[#allocation2 + $0x258] sm:$0xff]
    %v140 = vld [vmem:[#allocation2 + $0x260] sm:$0xff]
    %v141 = vld [vmem:[#allocation2 + $0x268] sm:$0xff]
    %v142 = vld [vmem:[#allocation2 + $0x270] sm:$0xff]
    %v143 = vld [vmem:[#allocation2 + $0x278] sm:$0xff]
    %v144 = vld [vmem:[#allocation2 + $0x280] sm:$0xff]
    %v145 = vld [vmem:[#allocation2 + $0x288] sm:$0xff]
    %v146 = vld [vmem:[#allocation2 + $0x290] sm:$0xff]
    %v147 = vld [vmem:[#allocation2 + $0x298] sm:$0xff]
    %v148 = vld [vmem:[#allocation2 + $0x2a0] sm:$0xff]
    %v149 = vld [vmem:[#allocation2 + $0x2a8] sm:$0xff]
    %v150 = vld [vmem:[#allocation2 + $0x2b0] sm:$0xff]
    %v151 = vld [vmem:[#allocation2 + $0x2b8] sm:$0xff]
    %v152 = vld [vmem:[#allocation2 + $0x2c0] sm:$0xff]
    %v153 = vld [vmem:[#allocation2 + $0x2c8] sm:$0xff]
    %v154 = vld [vmem:[#allocation2 + $0x2d0] sm:$0xff]
    %v155 = vld [vmem:[#allocation2 + $0x2d8] sm:$0xff]
    %v156 = vld [vmem:[#allocation2 + $0x2e0] sm:$0xff]
    %v157 = vld [vmem:[#allocation2 + $0x2e8] sm:$0xff]
    %v158 = vld [vmem:[#allocation2 + $0x2f0] sm:$0xff]
    %v159 = vld [vmem:[#allocation2 + $0x2f8] sm:$0xff]
    %v160 = vld [vmem:[#allocation2 + $0x300] sm:$0xff]
    %v161 = vld [vmem:[#allocation2 + $0x308] sm:$0xff]
    %v162 = vld [vmem:[%s2] sm:$0x3]
    %v164 = vperm.slane %v162, 0
    %v165 = vperm.slane %v162, 1
    %v266 = vunpack.c.l.b16 %v64
    %v267 = vunpack.c.h.b16 %v64
    %v268 = vunpack.c.l.b16 %v65
    %v269 = vunpack.c.h.b16 %v65
    %v270 = vunpack.c.l.b16 %v66
    %v271 = vunpack.c.h.b16 %v66
    %v272 = vunpack.c.l.b16 %v67
    %v273 = vunpack.c.h.b16 %v67
    %v274 = vunpack.c.l.b16 %v68
    %v275 = vunpack.c.h.b16 %v68
    %v276 = vunpack.c.l.b16 %v69
    %v277 = vunpack.c.h.b16 %v69
    %v278 = vunpack.c.l.b16 %v70
    %v279 = vunpack.c.h.b16 %v70
    %v280 = vunpack.c.l.b16 %v71
    %v281 = vunpack.c.h.b16 %v71
    %v282 = vunpack.c.l.b16 %v72
    %v283 = vunpack.c.h.b16 %v72
    %v284 = vunpack.c.l.b16 %v73
    %v285 = vunpack.c.h.b16 %v73
    %v286 = vunpack.c.l.b16 %v74
    %v287 = vunpack.c.h.b16 %v74
    %v288 = vunpack.c.l.b16 %v75
    %v289 = vunpack.c.h.b16 %v75
    %v290 = vunpack.c.l.b16 %v76
    %v291 = vunpack.c.h.b16 %v76
    %v292 = vunpack.c.l.b16 %v77
    %v293 = vunpack.c.h.b16 %v77
    %v294 = vunpack.c.l.b16 %v78
    %v295 = vunpack.c.h.b16 %v78
    %v296 = vunpack.c.l.b16 %v79
    %v297 = vunpack.c.h.b16 %v79
    %v298 = vunpack.c.l.b16 %v80
    %v299 = vunpack.c.h.b16 %v80
    %v300 = vunpack.c.l.b16 %v81
    %v301 = vunpack.c.h.b16 %v81
    %v302 = vunpack.c.l.b16 %v82
    %v303 = vunpack.c.h.b16 %v82
    %v304 = vunpack.c.l.b16 %v83
    %v305 = vunpack.c.h.b16 %v83
    %v306 = vunpack.c.l.b16 %v84
    %v307 = vunpack.c.h.b16 %v84
    %v308 = vunpack.c.l.b16 %v85
    %v309 = vunpack.c.h.b16 %v85
    %v310 = vunpack.c.l.b16 %v86
    %v311 = vunpack.c.h.b16 %v86
    %v312 = vunpack.c.l.b16 %v87
    %v313 = vunpack.c.h.b16 %v87
    %v314 = vunpack.c.l.b16 %v88
    %v315 = vunpack.c.h.b16 %v88
    %v316 = vunpack.c.l.b16 %v89
    %v317 = vunpack.c.h.b16 %v89
    %v318 = vunpack.c.l.b16 %v90
    %v319 = vunpack.c.h.b16 %v90
    %v320 = vunpack.c.l.b16 %v91
    %v321 = vunpack.c.h.b16 %v91
    %v322 = vunpack.c.l.b16 %v92
    %v323 = vunpack.c.h.b16 %v92
    %v324 = vunpack.c.l.b16 %v93
    %v325 = vunpack.c.h.b16 %v93
    %v326 = vunpack.c.l.b16 %v94
    %v327 = vunpack.c.h.b16 %v94
    %v328 = vunpack.c.l.b16 %v95
    %v329 = vunpack.c.h.b16 %v95
    %v330 = vunpack.c.l.b16 %v96
    %v331 = vunpack.c.h.b16 %v96
    %v332 = vunpack.c.l.b16 %v97
    %v333 = vunpack.c.h.b16 %v97
    %v334 = vunpack.c.l.b16 %v98
    %v335 = vunpack.c.h.b16 %v98
    %v336 = vunpack.c.l.b16 %v99
    %v337 = vunpack.c.h.b16 %v99
    %v338 = vunpack.c.l.b16 %v100
    %v339 = vunpack.c.h.b16 %v100
    %v340 = vunpack.c.l.b16 %v101
    %v341 = vunpack.c.h.b16 %v101
    %v342 = vunpack.c.l.b16 %v102
    %v343 = vunpack.c.h.b16 %v102
    %v344 = vunpack.c.l.b16 %v103
    %v345 = vunpack.c.h.b16 %v103
    %v346 = vunpack.c.l.b16 %v104
    %v347 = vunpack.c.h.b16 %v104
    %v348 = vunpack.c.l.b16 %v105
    %v349 = vunpack.c.h.b16 %v105
    %v350 = vunpack.c.l.b16 %v106
    %v351 = vunpack.c.h.b16 %v106
    %v352 = vunpack.c.l.b16 %v107
    %v353 = vunpack.c.h.b16 %v107
    %v354 = vunpack.c.l.b16 %v108
    %v355 = vunpack.c.h.b16 %v108
    %v356 = vunpack.c.l.b16 %v109
    %v357 = vunpack.c.h.b16 %v109
    %v358 = vunpack.c.l.b16 %v110
    %v359 = vunpack.c.h.b16 %v110
    %v360 = vunpack.c.l.b16 %v111
    %v361 = vunpack.c.h.b16 %v111
    %v362 = vunpack.c.l.b16 %v112
    %v363 = vunpack.c.h.b16 %v112
    %v364 = vunpack.c.l.b16 %v113
    %v365 = vunpack.c.h.b16 %v113
    %v366 = vunpack.c.l.b16 %v114
    %v367 = vunpack.c.h.b16 %v114
    %v368 = vunpack.c.l.b16 %v115
    %v369 = vunpack.c.h.b16 %v115
    %v370 = vunpack.c.l.b16 %v116
    %v371 = vunpack.c.h.b16 %v116
    %v372 = vunpack.c.l.b16 %v117
    %v373 = vunpack.c.h.b16 %v117
    %v374 = vunpack.c.l.b16 %v118
    %v375 = vunpack.c.h.b16 %v118
    %v376 = vunpack.c.l.b16 %v119
    %v377 = vunpack.c.h.b16 %v119
    %v378 = vunpack.c.l.b16 %v120
    %v379 = vunpack.c.h.b16 %v120
    %v380 = vunpack.c.l.b16 %v121
    %v381 = vunpack.c.h.b16 %v121
    %v382 = vunpack.c.l.b16 %v122
    %v383 = vunpack.c.h.b16 %v122
    %v384 = vunpack.c.l.b16 %v123
    %v385 = vunpack.c.h.b16 %v123
    %v386 = vunpack.c.l.b16 %v124
    %v387 = vunpack.c.h.b16 %v124
    %v388 = vunpack.c.l.b16 %v125
    %v389 = vunpack.c.h.b16 %v125
    %v390 = vunpack.c.l.b16 %v126
    %v391 = vunpack.c.h.b16 %v126
    %v392 = vunpack.c.l.b16 %v127
    %v393 = vunpack.c.h.b16 %v127
    %v394 = vunpack.c.l.b16 %v128
    %v395 = vunpack.c.h.b16 %v128
    %v396 = vunpack.c.l.b16 %v129
    %v397 = vunpack.c.h.b16 %v129
    %v398 = vunpack.c.l.b16 %v130
    %v399 = vunpack.c.h.b16 %v130
    %v400 = vunpack.c.l.b16 %v131
    %v401 = vunpack.c.h.b16 %v131
    %v402 = vunpack.c.l.b16 %v132
    %v403 = vunpack.c.h.b16 %v132
    %v404 = vunpack.c.l.b16 %v133
    %v405 = vunpack.c.h.b16 %v133
    %v406 = vunpack.c.l.b16 %v134
    %v407 = vunpack.c.h.b16 %v134
    %v408 = vunpack.c.l.b16 %v135
    %v409 = vunpack.c.h.b16 %v135
    %v410 = vunpack.c.l.b16 %v136
    %v411 = vunpack.c.h.b16 %v136
    %v412 = vunpack.c.l.b16 %v137
    %v413 = vunpack.c.h.b16 %v137
    %v414 = vunpack.c.l.b16 %v138
    %v415 = vunpack.c.h.b16 %v138
    %v416 = vunpack.c.l.b16 %v139
    %v417 = vunpack.c.h.b16 %v139
    %v418 = vunpack.c.l.b16 %v140
    %v419 = vunpack.c.h.b16 %v140
    %v420 = vunpack.c.l.b16 %v141
    %v421 = vunpack.c.h.b16 %v141
    %v422 = vunpack.c.l.b16 %v142
    %v423 = vunpack.c.h.b16 %v142
    %v424 = vunpack.c.l.b16 %v143
    %v425 = vunpack.c.h.b16 %v143
    %v426 = vunpack.c.l.b16 %v144
    %v427 = vunpack.c.h.b16 %v144
    %v428 = vunpack.c.l.b16 %v145
    %v429 = vunpack.c.h.b16 %v145
    %v430 = vunpack.c.l.b16 %v146
    %v431 = vunpack.c.h.b16 %v146
    %v432 = vunpack.c.l.b16 %v147
    %v433 = vunpack.c.h.b16 %v147
    %v434 = vunpack.c.l.b16 %v148
    %v435 = vunpack.c.h.b16 %v148
    %v436 = vunpack.c.l.b16 %v149
    %v437 = vunpack.c.h.b16 %v149
    %v438 = vunpack.c.l.b16 %v150
    %v439 = vunpack.c.h.b16 %v150
    %v440 = vunpack.c.l.b16 %v151
    %v441 = vunpack.c.h.b16 %v151
    %v442 = vunpack.c.l.b16 %v152
    %v443 = vunpack.c.h.b16 %v152
    %v444 = vunpack.c.l.b16 %v153
    %v445 = vunpack.c.h.b16 %v153
    %v446 = vunpack.c.l.b16 %v154
    %v447 = vunpack.c.h.b16 %v154
    %v448 = vunpack.c.l.b16 %v155
    %v449 = vunpack.c.h.b16 %v155
    %v450 = vunpack.c.l.b16 %v156
    %v451 = vunpack.c.h.b16 %v156
    %v452 = vunpack.c.l.b16 %v157
    %v453 = vunpack.c.h.b16 %v157
    %v454 = vunpack.c.l.b16 %v158
    %v455 = vunpack.c.h.b16 %v158
    %v456 = vunpack.c.l.b16 %v159
    %v457 = vunpack.c.h.b16 %v159
    %v458 = vunpack.c.l.b16 %v160
    %v459 = vunpack.c.h.b16 %v160
    %v460 = vunpack.c.l.b16 %v161
    %v461 = vunpack.c.h.b16 %v161
    %v462 = vpack.c.b16 %v268, %v266
    %v463 = vpack.c.b16 %v269, %v267
    %v464 = vpack.c.b16 %v272, %v270
    %v465 = vpack.c.b16 %v273, %v271
    %v466 = vpack.c.b16 %v276, %v274
    %v467 = vpack.c.b16 %v277, %v275
    %v468 = vpack.c.b16 %v280, %v278
    %v469 = vpack.c.b16 %v281, %v279
    %v470 = vpack.c.b16 %v284, %v282
    %v471 = vpack.c.b16 %v285, %v283
    %v472 = vpack.c.b16 %v288, %v286
    %v473 = vpack.c.b16 %v289, %v287
    %v474 = vpack.c.b16 %v292, %v290
    %v475 = vpack.c.b16 %v293, %v291
    %v476 = vpack.c.b16 %v296, %v294
    %v477 = vpack.c.b16 %v297, %v295
    %v478 = vpack.c.b16 %v300, %v298
    %v479 = vpack.c.b16 %v301, %v299
    %v480 = vpack.c.b16 %v304, %v302
    %v481 = vpack.c.b16 %v305, %v303
    %v482 = vpack.c.b16 %v308, %v306
    %v483 = vpack.c.b16 %v309, %v307
    %v484 = vpack.c.b16 %v312, %v310
    %v485 = vpack.c.b16 %v313, %v311
    %v486 = vpack.c.b16 %v316, %v314
    %v487 = vpack.c.b16 %v317, %v315
    %v488 = vpack.c.b16 %v320, %v318
    %v489 = vpack.c.b16 %v321, %v319
    %v490 = vpack.c.b16 %v324, %v322
    %v491 = vpack.c.b16 %v325, %v323
    %v492 = vpack.c.b16 %v328, %v326
    %v493 = vpack.c.b16 %v329, %v327
    %v494 = vpack.c.b16 %v332, %v330
    %v495 = vpack.c.b16 %v333, %v331
    %v496 = vpack.c.b16 %v336, %v334
    %v497 = vpack.c.b16 %v337, %v335
    %v498 = vpack.c.b16 %v340, %v338
    %v499 = vpack.c.b16 %v341, %v339
    %v500 = vpack.c.b16 %v344, %v342
    %v501 = vpack.c.b16 %v345, %v343
    %v502 = vpack.c.b16 %v348, %v346
    %v503 = vpack.c.b16 %v349, %v347
    %v504 = vpack.c.b16 %v352, %v350
    %v505 = vpack.c.b16 %v353, %v351
    %v506 = vpack.c.b16 %v356, %v354
    %v507 = vpack.c.b16 %v357, %v355
    %v508 = vpack.c.b16 %v360, %v358
    %v509 = vpack.c.b16 %v361, %v359
    %v510 = vpack.c.b16 %v364, %v362
    %v511 = vpack.c.b16 %v365, %v363
    %v512 = vpack.c.b16 %v368, %v366
    %v513 = vpack.c.b16 %v369, %v367
    %v514 = vpack.c.b16 %v372, %v370
    %v515 = vpack.c.b16 %v373, %v371
    %v516 = vpack.c.b16 %v376, %v374
    %v517 = vpack.c.b16 %v377, %v375
    %v518 = vpack.c.b16 %v380, %v378
    %v519 = vpack.c.b16 %v381, %v379
    %v520 = vpack.c.b16 %v384, %v382
    %v521 = vpack.c.b16 %v385, %v383
    %v522 = vpack.c.b16 %v388, %v386
    %v523 = vpack.c.b16 %v389, %v387
    %v524 = vpack.c.b16 %v392, %v390
    %v525 = vpack.c.b16 %v393, %v391
    %v526 = vpack.c.b16 %v396, %v394
    %v527 = vpack.c.b16 %v397, %v395
    %v528 = vpack.c.b16 %v400, %v398
    %v529 = vpack.c.b16 %v401, %v399
    %v530 = vpack.c.b16 %v404, %v402
    %v531 = vpack.c.b16 %v405, %v403
    %v532 = vpack.c.b16 %v408, %v406
    %v533 = vpack.c.b16 %v409, %v407
    %v534 = vpack.c.b16 %v412, %v410
    %v535 = vpack.c.b16 %v413, %v411
    %v536 = vpack.c.b16 %v416, %v414
    %v537 = vpack.c.b16 %v417, %v415
    %v538 = vpack.c.b16 %v420, %v418
    %v539 = vpack.c.b16 %v421, %v419
    %v540 = vpack.c.b16 %v424, %v422
    %v541 = vpack.c.b16 %v425, %v423
    %v542 = vpack.c.b16 %v428, %v426
    %v543 = vpack.c.b16 %v429, %v427
    %v544 = vpack.c.b16 %v432, %v430
    %v545 = vpack.c.b16 %v433, %v431
    %v546 = vpack.c.b16 %v436, %v434
    %v547 = vpack.c.b16 %v437, %v435
    %v548 = vpack.c.b16 %v440, %v438
    %v549 = vpack.c.b16 %v441, %v439
    %v550 = vpack.c.b16 %v444, %v442
    %v551 = vpack.c.b16 %v445, %v443
    %v552 = vpack.c.b16 %v448, %v446
    %v553 = vpack.c.b16 %v449, %v447
    %v554 = vpack.c.b16 %v452, %v450
    %v555 = vpack.c.b16 %v453, %v451
    %v556 = vpack.c.b16 %v456, %v454
    %v557 = vpack.c.b16 %v457, %v455
    %v558 = vpack.c.b16 %v460, %v458
    %v559 = vpack.c.b16 %v461, %v459
    %vm658 = vcmask 130048
    %v660 = vsel %vm658, %v63, 0
    %662 = vmatpush.bf16.msra.mxu0 %v476
    %663 = vmatpush.bf16.msra.mxu0 %v474
    %664 = vmatpush.bf16.msra.mxu0 %v472
    %665 = vmatpush.bf16.msra.mxu0 %v470
    %666 = vmatpush.bf16.msra.mxu0 %v468
    %667 = vmatpush.bf16.msra.mxu0 %v466
    %668 = vmatpush.bf16.msra.mxu0 %v464
    %669 = vmatpush.bf16.msra.mxu0 %v462
    %670 = vmatmul.bf16.gmra.mxu0 %v57
    %v671 = vpop.f32.mrf.mxu0
    %v672 = vadd.f32 %v164, %v671
    %v673 = vpop.f32.mrf.mxu0
    %v674 = vadd.f32 %v164, %v673
    %675 = vdwg.mxu0
    %676 = vmatpush.bf16.msra.mxu0 %v492
    %677 = vmatpush.bf16.msra.mxu0 %v490
    %678 = vmatpush.bf16.msra.mxu0 %v488
    %679 = vmatpush.bf16.msra.mxu0 %v486
    %680 = vmatpush.bf16.msra.mxu0 %v484
    %681 = vmatpush.bf16.msra.mxu0 %v482
    %682 = vmatpush.bf16.msra.mxu0 %v480
    %683 = vmatpush.bf16.msra.mxu0 %v478
    %684 = vmatmul.bf16.gmra.mxu0 %v58
    %v685 = vpop.f32.mrf.mxu0
    %v686 = vadd.f32 %v672, %v685
    %v687 = vpop.f32.mrf.mxu0
    %v688 = vadd.f32 %v674, %v687
    %689 = vdwg.mxu0
    %690 = vmatpush.bf16.msra.mxu0 %v508
    %691 = vmatpush.bf16.msra.mxu0 %v506
    %692 = vmatpush.bf16.msra.mxu0 %v504
    %693 = vmatpush.bf16.msra.mxu0 %v502
    %694 = vmatpush.bf16.msra.mxu0 %v500
    %695 = vmatpush.bf16.msra.mxu0 %v498
    %696 = vmatpush.bf16.msra.mxu0 %v496
    %697 = vmatpush.bf16.msra.mxu0 %v494
    %698 = vmatmul.bf16.gmra.mxu0 %v59
    %v699 = vpop.f32.mrf.mxu0
    %v700 = vadd.f32 %v686, %v699
    %v701 = vpop.f32.mrf.mxu0
    %v702 = vadd.f32 %v688, %v701
    %703 = vdwg.mxu0
    %704 = vmatpush.bf16.msra.mxu0 %v524
    %705 = vmatpush.bf16.msra.mxu0 %v522
    %706 = vmatpush.bf16.msra.mxu0 %v520
    %707 = vmatpush.bf16.msra.mxu0 %v518
    %708 = vmatpush.bf16.msra.mxu0 %v516
    %709 = vmatpush.bf16.msra.mxu0 %v514
    %710 = vmatpush.bf16.msra.mxu0 %v512
    %711 = vmatpush.bf16.msra.mxu0 %v510
    %712 = vmatmul.bf16.gmra.mxu0 %v60
    %v713 = vpop.f32.mrf.mxu0
    %v714 = vadd.f32 %v700, %v713
    %v715 = vpop.f32.mrf.mxu0
    %v716 = vadd.f32 %v702, %v715
    %717 = vdwg.mxu0
    %718 = vmatpush.bf16.msra.mxu0 %v540
    %719 = vmatpush.bf16.msra.mxu0 %v538
    %720 = vmatpush.bf16.msra.mxu0 %v536
    %721 = vmatpush.bf16.msra.mxu0 %v534
    %722 = vmatpush.bf16.msra.mxu0 %v532
    %723 = vmatpush.bf16.msra.mxu0 %v530
    %724 = vmatpush.bf16.msra.mxu0 %v528
    %725 = vmatpush.bf16.msra.mxu0 %v526
    %726 = vmatmul.bf16.gmra.mxu0 %v61
    %v727 = vpop.f32.mrf.mxu0
    %v728 = vadd.f32 %v714, %v727
    %v729 = vpop.f32.mrf.mxu0
    %v730 = vadd.f32 %v716, %v729
    %731 = vdwg.mxu0
    %732 = vmatpush.bf16.msra.mxu0 %v556
    %733 = vmatpush.bf16.msra.mxu0 %v554
    %734 = vmatpush.bf16.msra.mxu0 %v552
    %735 = vmatpush.bf16.msra.mxu0 %v550
    %736 = vmatpush.bf16.msra.mxu0 %v548
    %737 = vmatpush.bf16.msra.mxu0 %v546
    %738 = vmatpush.bf16.msra.mxu0 %v544
    %739 = vmatpush.bf16.msra.mxu0 %v542
    %740 = vmatmul.bf16.gmra.mxu0 %v62
    %v741 = vpop.f32.mrf.mxu0
    %v742 = vadd.f32 %v728, %v741
    %v743 = vpop.f32.mrf.mxu0
    %v744 = vadd.f32 %v730, %v743
    %745 = vdwg.mxu0
    %746 = vmatpush.bf16.msra.mxu0 0
    %747 = vmatpush.bf16.msra.mxu0 0
    %748 = vmatpush.bf16.msra.mxu0 0
    %749 = vmatpush.bf16.msra.mxu0 0
    %750 = vmatpush.bf16.msra.mxu0 0
    %751 = vmatpush.bf16.msra.mxu0 0
    %752 = vmatpush.bf16.msra.mxu0 0
    %753 = vmatpush.bf16.msra.mxu0 %v558
    %754 = vmatmul.bf16.gmra.mxu0 %v660
    %v755 = vpop.f32.mrf.mxu0
    %v756 = vadd.f32 %v742, %v755
    %v757 = vpop.f32.mrf.mxu0
    %v758 = vadd.f32 %v744, %v757
    %759 = vdwg.mxu0
    %760 = vmatpush.bf16.msra.mxu0 %v477
    %761 = vmatpush.bf16.msra.mxu0 %v475
    %762 = vmatpush.bf16.msra.mxu0 %v473
    %763 = vmatpush.bf16.msra.mxu0 %v471
    %764 = vmatpush.bf16.msra.mxu0 %v469
    %765 = vmatpush.bf16.msra.mxu0 %v467
    %766 = vmatpush.bf16.msra.mxu0 %v465
    %767 = vmatpush.bf16.msra.mxu0 %v463
    %768 = vmatmul.bf16.gmra.mxu0 %v57
    %v769 = vpop.f32.mrf.mxu0
    %v770 = vadd.f32 %v165, %v769
    %v771 = vpop.f32.mrf.mxu0
    %v772 = vadd.f32 %v165, %v771
    %773 = vdwg.mxu0
    %774 = vmatpush.bf16.msra.mxu0 %v493
    %775 = vmatpush.bf16.msra.mxu0 %v491
    %776 = vmatpush.bf16.msra.mxu0 %v489
    %777 = vmatpush.bf16.msra.mxu0 %v487
    %778 = vmatpush.bf16.msra.mxu0 %v485
    %779 = vmatpush.bf16.msra.mxu0 %v483
    %780 = vmatpush.bf16.msra.mxu0 %v481
    %781 = vmatpush.bf16.msra.mxu0 %v479
    %782 = vmatmul.bf16.gmra.mxu0 %v58
    %v783 = vpop.f32.mrf.mxu0
    %v784 = vadd.f32 %v770, %v783
    %v785 = vpop.f32.mrf.mxu0
    %v786 = vadd.f32 %v772, %v785
    %787 = vdwg.mxu0
    %788 = vmatpush.bf16.msra.mxu0 %v509
    %789 = vmatpush.bf16.msra.mxu0 %v507
    %790 = vmatpush.bf16.msra.mxu0 %v505
    %791 = vmatpush.bf16.msra.mxu0 %v503
    %792 = vmatpush.bf16.msra.mxu0 %v501
    %793 = vmatpush.bf16.msra.mxu0 %v499
    %794 = vmatpush.bf16.msra.mxu0 %v497
    %795 = vmatpush.bf16.msra.mxu0 %v495
    %796 = vmatmul.bf16.gmra.mxu0 %v59
    %v797 = vpop.f32.mrf.mxu0
    %v798 = vadd.f32 %v784, %v797
    %v799 = vpop.f32.mrf.mxu0
    %v800 = vadd.f32 %v786, %v799
    %801 = vdwg.mxu0
    %802 = vmatpush.bf16.msra.mxu0 %v525
    %803 = vmatpush.bf16.msra.mxu0 %v523
    %804 = vmatpush.bf16.msra.mxu0 %v521
    %805 = vmatpush.bf16.msra.mxu0 %v519
    %806 = vmatpush.bf16.msra.mxu0 %v517
    %807 = vmatpush.bf16.msra.mxu0 %v515
    %808 = vmatpush.bf16.msra.mxu0 %v513
    %809 = vmatpush.bf16.msra.mxu0 %v511
    %810 = vmatmul.bf16.gmra.mxu0 %v60
    %v811 = vpop.f32.mrf.mxu0
    %v812 = vadd.f32 %v798, %v811
    %v813 = vpop.f32.mrf.mxu0
    %v814 = vadd.f32 %v800, %v813
    %815 = vdwg.mxu0
    %816 = vmatpush.bf16.msra.mxu0 %v541
    %817 = vmatpush.bf16.msra.mxu0 %v539
    %818 = vmatpush.bf16.msra.mxu0 %v537
    %819 = vmatpush.bf16.msra.mxu0 %v535
    %820 = vmatpush.bf16.msra.mxu0 %v533
    %821 = vmatpush.bf16.msra.mxu0 %v531
    %822 = vmatpush.bf16.msra.mxu0 %v529
    %823 = vmatpush.bf16.msra.mxu0 %v527
    %824 = vmatmul.bf16.gmra.mxu0 %v61
    %v825 = vpop.f32.mrf.mxu0
    %v826 = vadd.f32 %v812, %v825
    %v827 = vpop.f32.mrf.mxu0
    %v828 = vadd.f32 %v814, %v827
    %829 = vdwg.mxu0
    %830 = vmatpush.bf16.msra.mxu0 %v557
    %831 = vmatpush.bf16.msra.mxu0 %v555
    %832 = vmatpush.bf16.msra.mxu0 %v553
    %833 = vmatpush.bf16.msra.mxu0 %v551
    %834 = vmatpush.bf16.msra.mxu0 %v549
    %835 = vmatpush.bf16.msra.mxu0 %v547
    %836 = vmatpush.bf16.msra.mxu0 %v545
    %837 = vmatpush.bf16.msra.mxu0 %v543
    %838 = vmatmul.bf16.gmra.mxu0 %v62
    %v839 = vpop.f32.mrf.mxu0
    %v840 = vadd.f32 %v826, %v839
    %v841 = vpop.f32.mrf.mxu0
    %v842 = vadd.f32 %v828, %v841
    %843 = vdwg.mxu0
    %844 = vmatpush.bf16.msra.mxu0 0
    %845 = vmatpush.bf16.msra.mxu0 0
    %846 = vmatpush.bf16.msra.mxu0 0
    %847 = vmatpush.bf16.msra.mxu0 0
    %848 = vmatpush.bf16.msra.mxu0 0
    %849 = vmatpush.bf16.msra.mxu0 0
    %850 = vmatpush.bf16.msra.mxu0 0
    %851 = vmatpush.bf16.msra.mxu0 %v559
    %852 = vmatmul.bf16.gmra.mxu0 %v660
    %v853 = vpop.f32.mrf.mxu0
    %v854 = vadd.f32 %v840, %v853
    %v855 = vpop.f32.mrf.mxu0
    %v856 = vadd.f32 %v842, %v855
    %857 = vdwg.mxu0
    %v858 = vmax.f32 %v756, 0.0
    %v859 = vmax.f32 %v854, 0.0
    %v860 = vmax.f32 %v758, 0.0
    %v861 = vmax.f32 %v856, 0.0
    %v862 = vpack.c.bf16 %v860, %v858
    %v863 = vpack.c.bf16 %v861, %v859
    %v864 = vld [vmem:[%s3] sm:$0xf]
    %v865 = vld [vmem:[%s3 + $0x4] sm:$0xf]
    %v866 = vld [vmem:[%s3 + $0x8] sm:$0xf]
    %v867 = vld [vmem:[%s3 + $0xc] sm:$0xf]
    %v868 = vld [vmem:[%s3 + $0x10] sm:$0xf]
    %v869 = vld [vmem:[%s3 + $0x14] sm:$0xf]
    %v870 = vld [vmem:[%s3 + $0x18] sm:$0xf]
    %v871 = vld [vmem:[%s3 + $0x1c] sm:$0xf]
    %v872 = vld [vmem:[%s3 + $0x20] sm:$0xf]
    %v873 = vld [vmem:[%s3 + $0x24] sm:$0xf]
    %v874 = vld [vmem:[%s3 + $0x28] sm:$0xf]
    %v875 = vld [vmem:[%s3 + $0x2c] sm:$0xf]
    %v876 = vld [vmem:[%s3 + $0x30] sm:$0xf]
    %v877 = vld [vmem:[%s3 + $0x34] sm:$0xf]
    %v878 = vld [vmem:[%s3 + $0x38] sm:$0xf]
    %v879 = vld [vmem:[%s3 + $0x3c] sm:$0xf]
    %v880 = vld [vmem:[%s3 + $0x40] sm:$0xf]
    %v881 = vld [vmem:[%s3 + $0x44] sm:$0xf]
    %v882 = vld [vmem:[%s3 + $0x48] sm:$0xf]
    %v883 = vld [vmem:[%s3 + $0x4c] sm:$0xf]
    %v884 = vld [vmem:[%s3 + $0x50] sm:$0xf]
    %v885 = vld [vmem:[%s3 + $0x54] sm:$0xf]
    %v886 = vld [vmem:[%s3 + $0x58] sm:$0xf]
    %v887 = vld [vmem:[%s3 + $0x5c] sm:$0xf]
    %v888 = vld [vmem:[%s3 + $0x60] sm:$0xf]
    %v889 = vld [vmem:[%s3 + $0x64] sm:$0xf]
    %v890 = vld [vmem:[%s3 + $0x68] sm:$0xf]
    %v891 = vld [vmem:[%s3 + $0x6c] sm:$0xf]
    %v892 = vld [vmem:[%s3 + $0x70] sm:$0xf]
    %v893 = vld [vmem:[%s3 + $0x74] sm:$0xf]
    %v894 = vld [vmem:[%s3 + $0x78] sm:$0xf]
    %v895 = vld [vmem:[%s3 + $0x7c] sm:$0xf]
    %v896 = vld [vmem:[%s4] sm:$0x1]
    %v898 = vperm.slane %v896, 0
    %v932 = vunpack.c.l.b16 %v864
    %v933 = vunpack.c.l.b16 %v865
    %v934 = vunpack.c.l.b16 %v866
    %v935 = vunpack.c.l.b16 %v867
    %v936 = vunpack.c.l.b16 %v868
    %v937 = vunpack.c.l.b16 %v869
    %v938 = vunpack.c.l.b16 %v870
    %v939 = vunpack.c.l.b16 %v871
    %v940 = vunpack.c.l.b16 %v872
    %v941 = vunpack.c.l.b16 %v873
    %v942 = vunpack.c.l.b16 %v874
    %v943 = vunpack.c.l.b16 %v875
    %v944 = vunpack.c.l.b16 %v876
    %v945 = vunpack.c.l.b16 %v877
    %v946 = vunpack.c.l.b16 %v878
    %v947 = vunpack.c.l.b16 %v879
    %v948 = vunpack.c.l.b16 %v880
    %v949 = vunpack.c.l.b16 %v881
    %v950 = vunpack.c.l.b16 %v882
    %v951 = vunpack.c.l.b16 %v883
    %v952 = vunpack.c.l.b16 %v884
    %v953 = vunpack.c.l.b16 %v885
    %v954 = vunpack.c.l.b16 %v886
    %v955 = vunpack.c.l.b16 %v887
    %v956 = vunpack.c.l.b16 %v888
    %v957 = vunpack.c.l.b16 %v889
    %v958 = vunpack.c.l.b16 %v890
    %v959 = vunpack.c.l.b16 %v891
    %v960 = vunpack.c.l.b16 %v892
    %v961 = vunpack.c.l.b16 %v893
    %v962 = vunpack.c.l.b16 %v894
    %v963 = vunpack.c.l.b16 %v895
    %v964 = vpack.c.b16 %v933, %v932
    %v965 = vpack.c.b16 %v935, %v934
    %v966 = vpack.c.b16 %v937, %v936
    %v967 = vpack.c.b16 %v939, %v938
    %v968 = vpack.c.b16 %v941, %v940
    %v969 = vpack.c.b16 %v943, %v942
    %v970 = vpack.c.b16 %v945, %v944
    %v971 = vpack.c.b16 %v947, %v946
    %v972 = vpack.c.b16 %v949, %v948
    %v973 = vpack.c.b16 %v951, %v950
    %v974 = vpack.c.b16 %v953, %v952
    %v975 = vpack.c.b16 %v955, %v954
    %v976 = vpack.c.b16 %v957, %v956
    %v977 = vpack.c.b16 %v959, %v958
    %v978 = vpack.c.b16 %v961, %v960
    %v979 = vpack.c.b16 %v963, %v962
    %996 = vmatpush.bf16.msra.mxu0 %v971
    %997 = vmatpush.bf16.msra.mxu0 %v970
    %998 = vmatpush.bf16.msra.mxu0 %v969
    %999 = vmatpush.bf16.msra.mxu0 %v968
    %1000 = vmatpush.bf16.msra.mxu0 %v967
    %1001 = vmatpush.bf16.msra.mxu0 %v966
    %1002 = vmatpush.bf16.msra.mxu0 %v965
    %1003 = vmatpush.bf16.msra.mxu0 %v964
    %1004 = vmatmul.bf16.gmra.mxu0 %v862
    %v1005 = vpop.f32.mrf.mxu0
    %v1006 = vadd.f32 %v898, %v1005
    %v1007 = vpop.f32.mrf.mxu0
    %v1008 = vadd.f32 %v898, %v1007
    %1009 = vdwg.mxu0
    %1010 = vmatpush.bf16.msra.mxu0 %v979
    %1011 = vmatpush.bf16.msra.mxu0 %v978
    %1012 = vmatpush.bf16.msra.mxu0 %v977
    %1013 = vmatpush.bf16.msra.mxu0 %v976
    %1014 = vmatpush.bf16.msra.mxu0 %v975
    %1015 = vmatpush.bf16.msra.mxu0 %v974
    %1016 = vmatpush.bf16.msra.mxu0 %v973
    %1017 = vmatpush.bf16.msra.mxu0 %v972
    %1018 = vmatmul.bf16.gmra.mxu0 %v863
    %v1019 = vpop.f32.mrf.mxu0
    %v1020 = vadd.f32 %v1006, %v1019
    %v1021 = vpop.f32.mrf.mxu0
    %v1022 = vadd.f32 %v1008, %v1021
    %1023 = vdwg.mxu0
    %v1024 = vmax.f32 %v1020, 0.0
    %v1025 = vmax.f32 %v1022, 0.0
    %v1026 = vpack.c.bf16 %v1025, %v1024
    %v1027 = vld [vmem:[%s5] sm:$0xf]
    %v1028 = vld [vmem:[%s5 + $0x4] sm:$0xf]
    %v1029 = vld [vmem:[%s5 + $0x8] sm:$0xf]
    %v1030 = vld [vmem:[%s5 + $0xc] sm:$0xf]
    %v1031 = vld [vmem:[%s5 + $0x10] sm:$0xf]
    %v1032 = vld [vmem:[%s5 + $0x14] sm:$0xf]
    %v1033 = vld [vmem:[%s5 + $0x18] sm:$0xf]
    %v1034 = vld [vmem:[%s5 + $0x1c] sm:$0xf]
    %v1035 = vld [vmem:[%s5 + $0x20] sm:$0xf]
    %v1036 = vld [vmem:[%s5 + $0x24] sm:$0xf]
    %v1037 = vld [vmem:[%s5 + $0x28] sm:$0xf]
    %v1038 = vld [vmem:[%s5 + $0x2c] sm:$0xf]
    %v1039 = vld [vmem:[%s5 + $0x30] sm:$0xf]
    %v1040 = vld [vmem:[%s5 + $0x34] sm:$0xf]
    %v1041 = vld [vmem:[%s5 + $0x38] sm:$0xf]
    %v1042 = vld [vmem:[%s5 + $0x3c] sm:$0xf]
    %v1043 = vld [vmem:[%s6] sm:$0x1]
    %v1045 = vperm.slane %v1043, 0
    %v1063 = vunpack.c.l.b16 %v1027
    %v1064 = vunpack.c.l.b16 %v1028
    %v1065 = vunpack.c.l.b16 %v1029
    %v1066 = vunpack.c.l.b16 %v1030
    %v1067 = vunpack.c.l.b16 %v1031
    %v1068 = vunpack.c.l.b16 %v1032
    %v1069 = vunpack.c.l.b16 %v1033
    %v1070 = vunpack.c.l.b16 %v1034
    %v1071 = vunpack.c.l.b16 %v1035
    %v1072 = vunpack.c.l.b16 %v1036
    %v1073 = vunpack.c.l.b16 %v1037
    %v1074 = vunpack.c.l.b16 %v1038
    %v1075 = vunpack.c.l.b16 %v1039
    %v1076 = vunpack.c.l.b16 %v1040
    %v1077 = vunpack.c.l.b16 %v1041
    %v1078 = vunpack.c.l.b16 %v1042
    %v1079 = vpack.c.b16 %v1064, %v1063
    %v1080 = vpack.c.b16 %v1066, %v1065
    %v1081 = vpack.c.b16 %v1068, %v1067
    %v1082 = vpack.c.b16 %v1070, %v1069
    %v1083 = vpack.c.b16 %v1072, %v1071
    %v1084 = vpack.c.b16 %v1074, %v1073
    %v1085 = vpack.c.b16 %v1076, %v1075
    %v1086 = vpack.c.b16 %v1078, %v1077
    %1095 = vmatpush.bf16.msra.mxu0 %v1086
    %1096 = vmatpush.bf16.msra.mxu0 %v1085
    %1097 = vmatpush.bf16.msra.mxu0 %v1084
    %1098 = vmatpush.bf16.msra.mxu0 %v1083
    %1099 = vmatpush.bf16.msra.mxu0 %v1082
    %1100 = vmatpush.bf16.msra.mxu0 %v1081
    %1101 = vmatpush.bf16.msra.mxu0 %v1080
    %1102 = vmatpush.bf16.msra.mxu0 %v1079
    %1103 = vmatmul.bf16.gmra.mxu0 %v1026
    %v1104 = vpop.f32.mrf.mxu0
    %v1105 = vadd.f32 %v1045, %v1104
    %v1106 = vpop.f32.mrf.mxu0
    %v1107 = vadd.f32 %v1045, %v1106
    %1108 = vdwg.mxu0
    %v1109 = vpack.c.bf16 %v1105, %v1105
    %v1110 = vpack.c.bf16 %v1107, %v1107
    %1111 = vst [vmem:[%s7] sm:$0xf] %v1109
    %1112 = vst [vmem:[%s7 + $0x4] sm:$0xf] %v1110
    // Predicated region
    $region34: #{mlp_forward.1} parent=1 // pred_check
      _
    $region35: #{mlp_forward.1} parent=1 // pred_check_branch
      %1114 = sbr.rel (0) target = $region37
    $region36: #{mlp_forward.1} parent=1 // pred_region
      _
    $region37: #{mlp_forward.1} parent=1 // pred_fallthru
      _
    // Predicated region
    $region38: #{mlp_forward.1} parent=1 // pred_check
      _
    $region39: #{mlp_forward.1} parent=1 // pred_check_branch
      %1116 = sbr.rel (0) target = $region41
    $region40: #{mlp_forward.1} parent=1 // pred_region
      _
    $region41: #{mlp_forward.1} parent=1 // pred_fallthru
      _
    %1117 = vsyncpa [#allocation3], 1

</llo_original>
